<compile_context>
chip_gen: v5e
topology: v5e:2x2
jax: 0.10.0
libtpu: 0.0.40
codegen_flags: <defaults>
</compile_context>

<pallas_src>
import functools

import numpy as np
import jax
import jax.numpy as jnp
from jax.experimental import pallas as pl
from jax.experimental.pallas import tpu as pltpu


def _fused_dsconv_kernel(x_ref, p_ref, o_ref, ypad_ref, *,
                         cin, cout, h, w, kt, kf, dt, df, pad_t, pad_f0):
    """One batch sample per grid step; all channels packed into lanes.

    Lane layout of every (h, cout*w) tile: lane = co * w + freq.

    x_ref   : (1, Cin, H, W)              VMEM input block (NCHW, one sample)
    p_ref   : (Cin + kt*kf + 2, Cout*W)   lane-expanded parameters:
                rows [0, Cin)               pointwise weights (per input chan)
                row  Cin                    pointwise bias
                rows [Cin+1, Cin+1+kt*kf)   depthwise tap weights with the
                                            frequency-padding mask baked in
                row  Cin+1+kt*kf            depthwise bias
    o_ref   : (1, H, Cout*W)              VMEM output block (lane-dense)
    ypad_ref: (pad_t+H, pf0+Cout*W+pf1)   scratch: zero margins + pointwise out
    """
    cw = cout * w
    p = p_ref[...]
    wp = p[0:cin, :]                                    # (Cin, CW)
    bp = p[cin:cin + 1, :]                              # (1, CW)
    wd = p[cin + 1:cin + 1 + kt * kf, :]                # (kt*kf, CW)
    bd = p[cin + 1 + kt * kf:cin + 2 + kt * kf, :]      # (1, CW)

    # ---- Stage 1: 1x1 pointwise conv, vectorised over all Cout channels.
    # Each input plane is replicated across the Cout lane groups once and
    # FMA'd against lane-expanded weights, so every VPU op uses 128 lanes.
    y = None
    for ci in range(cin):
        rep = jnp.tile(x_ref[0, ci], (1, cout))          # (H, W) -> (H, CW)
        term = rep * wp[ci:ci + 1, :]
        y = term if y is None else y + term
    y = y + bp                                           # (H, CW)

    # ---- Stage 2: causal depthwise dilated conv.
    # Zero margins give the causal (time) padding; frequency padding (and any
    # cross-channel lane leakage of the shifted windows) is killed by the
    # zeros baked into the depthwise tap weights.
    ypad_ref[...] = jnp.zeros_like(ypad_ref)
    ypad_ref[pad_t:pad_t + h, pad_f0:pad_f0 + cw] = y

    out = None
    for it in range(kt):
        r = it * dt                                      # row window start
        for jf in range(kf):
            c = jf * df                                  # lane window start
            if r == pad_t and c == pad_f0:
                tap = y                                  # the untouched tap
            else:
                tap = ypad_ref[r:r + h, c:c + cw]        # static window read
            term = tap * wd[it * kf + jf:it * kf + jf + 1, :]
            out = term if out is None else out + term
    o_ref[0] = (out + bd).astype(o_ref.dtype)


def _expand_params(wp, bp, wd, bd, w, df, pad_f0):
    """Lane-expand all parameters to the (co*W + freq) lane layout and stack
    them into a single (Cin + kt*kf + 2, Cout*W) block.  The frequency-padding
    validity mask is folded into the depthwise tap weights."""
    cout, cin = wp.shape
    _, kt, kf = wd.shape
    wp_lane = jnp.repeat(wp.T, w, axis=1)                # (Cin, Cout*W)
    bp_lane = jnp.repeat(bp, w)[None, :]                 # (1, Cout*W)
    bd_lane = jnp.repeat(bd, w)[None, :]                 # (1, Cout*W)

    x_idx = jnp.arange(w)
    rows = []
    for it in range(kt):
        for jf in range(kf):
            ow = jf * df - pad_f0                        # frequency offset
            valid = ((x_idx + ow) >= 0) & ((x_idx + ow) < w)      # (W,)
            row = jnp.repeat(wd[:, it, jf], w) * jnp.tile(valid, cout).astype(wd.dtype)
            rows.append(row)
    wd_lane = jnp.stack(rows, axis=0)                    # (kt*kf, Cout*W)

    return jnp.concatenate([wp_lane, bp_lane, wd_lane, bd_lane], axis=0)


def depth_sep_conv2d(x, wp, bp, wd, bd, *, kernel_size, stride=(1, 1),
                     dilation=(1, 1)):
    """Forward of DepthSepConv2d (normal=False, causal=True):
       depth_conv(point_conv(x)), fused into a single Pallas kernel.

    x : (N, Cin, H, W) f32
    wp: (Cout, Cin)    point_conv weight (torch (Cout,Cin,1,1) squeezed)
    bp: (Cout,)        point_conv bias
    wd: (Cout, kt, kf) depth_conv weight (torch (Cout,1,kt,kf) squeezed)
    bd: (Cout,)        depth_conv bias
    """
    n, cin, h, w = x.shape
    cout = wp.shape[0]
    kt, kf = kernel_size
    dt, df = dilation
    st, sf = stride
    assert (st, sf) == (1, 1)   # TODO(synk): stride > 1 not implemented.
    eff_kt = kt + (kt - 1) * (dt - 1)
    eff_kf = kf + (kf - 1) * (df - 1)
    assert eff_kt > 1           # TODO(synk): eff_k_t == 1 'same' branch not implemented.
    pad_t = eff_kt - 1                       # causal: all time padding in front
    pad_f0 = (eff_kf - 1) // 2               # centred frequency padding
    pad_f1 = eff_kf - 1 - pad_f0

    cw = cout * w
    params = _expand_params(wp, bp, wd, bd, w, df, pad_f0)   # (cin+kt*kf+2, cw)

    kern = functools.partial(
        _fused_dsconv_kernel, cin=cin, cout=cout, h=h, w=w,
        kt=kt, kf=kf, dt=dt, df=df, pad_t=pad_t, pad_f0=pad_f0)

    out_lane = pl.pallas_call(
        kern,
        out_shape=jax.ShapeDtypeStruct((n, h, cw), jnp.float32),
        grid_spec=pltpu.PrefetchScalarGridSpec(
            num_scalar_prefetch=0,
            grid=(n,),
            in_specs=[
                pl.BlockSpec((1, cin, h, w), lambda i: (i, 0, 0, 0)),
                pl.BlockSpec((cin + kt * kf + 2, cw), lambda i: (0, 0)),
            ],
            out_specs=pl.BlockSpec((1, h, cw), lambda i: (i, 0, 0)),
            scratch_shapes=[
                pltpu.VMEM((pad_t + h, pad_f0 + cw + pad_f1), jnp.float32)],
        ),
        compiler_params=pltpu.CompilerParams(
            dimension_semantics=("parallel",)),
    )(x, params)

    # Lane-dense (N, H, Cout*W) kernel output back to the module's NCHW layout.
    return out_lane.reshape(n, h, cout, w).transpose(0, 2, 1, 3)


# ---------------------------------------------------------------------------
# Pure-JAX reference (same semantics as the PyTorch module) for verification.
# ---------------------------------------------------------------------------
def reference(x, wp, bp, wd, bd, kernel_size, dilation):
    cout, cin = wp.shape
    y = jax.lax.conv_general_dilated(
        x, wp.reshape(cout, cin, 1, 1), (1, 1), "VALID",
        dimension_numbers=("NCHW", "OIHW", "NCHW"),
    ) + bp[None, :, None, None]
    kt, kf = kernel_size
    dt, df = dilation
    eff_kt = kt + (kt - 1) * (dt - 1)
    eff_kf = kf + (kf - 1) * (df - 1)
    pad_f0 = (eff_kf - 1) // 2
    pad_f1 = eff_kf - 1 - pad_f0
    y_pad = jnp.pad(y, ((0, 0), (0, 0), (eff_kt - 1, 0), (pad_f0, pad_f1)))
    out = jax.lax.conv_general_dilated(
        y_pad, wd.reshape(cout, 1, kt, kf), (1, 1), "VALID",
        rhs_dilation=(dt, df),
        dimension_numbers=("NCHW", "OIHW", "NCHW"),
        feature_group_count=cout,
    ) + bd[None, :, None, None]
    return out


if __name__ == "__main__":
    # Module config: DepthSepConv2d(in=4, out=8, kernel_size=(2,3), stride=(1,1))
    N, Cin, H, W = 2, 4, 16, 16
    Cout = 8
    kernel_size = (2, 3)
    stride = (1, 1)
    dilation = (1, 1)

    key = jax.random.PRNGKey(0)
    k1, k2, k3, k4, k5 = jax.random.split(key, 5)
    x = jax.random.normal(k1, (N, Cin, H, W), jnp.float32)
    # Deterministic synthetic parameters (shapes from nn.Conv2d in __init__).
    wp = jax.random.normal(k2, (Cout, Cin), jnp.float32) * 0.5      # point_conv weight
    bp = jax.random.normal(k3, (Cout,), jnp.float32) * 0.1          # point_conv bias
    wd = jax.random.normal(k4, (Cout, kernel_size[0], kernel_size[1]), jnp.float32) * 0.5  # depth_conv weight
    bd = jax.random.normal(k5, (Cout,), jnp.float32) * 0.1          # depth_conv bias

    fn = jax.jit(functools.partial(depth_sep_conv2d, kernel_size=kernel_size,
                                   stride=stride, dilation=dilation))
    out = jax.block_until_ready(fn(x, wp, bp, wd, bd))

    ref = reference(x, wp, bp, wd, bd, kernel_size, dilation)
    assert out.shape == (N, Cout, H, W), out.shape
    np.testing.assert_allclose(np.asarray(out), np.asarray(ref), rtol=1e-5, atol=1e-5)
    print("KERNEL_OK")
</pallas_src>

<mosaic_0001>
module attributes {stable_mosaic.version = 11 : i64} {
  func.func @_fused_dsconv_kernel(%arg0: i32, %arg1: memref<1x4x16x16xf32, #tpu.memory_space<vmem>>, %arg2: memref<12x128xf32, #tpu.memory_space<vmem>>, %arg3: memref<1x16x128xf32, #tpu.memory_space<vmem>>, %arg4: memref<17x130xf32, #tpu.memory_space<vmem>>) attributes {dimension_semantics = [#tpu.dimension_semantics<parallel>], iteration_bounds = array<i64: 2>, scalar_prefetch = 0 : i64, scratch_operands = 1 : i64, tpu.core_type = #tpu.core_type<tc>, window_params = [{transform_indices = @transform_0, window_bounds = array<i64: 1, 4, 16, 16>}, {pipeline_mode = #tpu.pipeline_mode<synchronous>, transform_indices = @transform_1, window_bounds = array<i64: 12, 128>}, {transform_indices = @transform_2, window_bounds = array<i64: 1, 16, 128>}]} {
    %c0 = arith.constant 0 : index
    %c0_0 = arith.constant 0 : index
    %0 = vector.load %arg2[%c0, %c0_0] : memref<12x128xf32, #tpu.memory_space<vmem>>, vector<12x128xf32>
    %1 = vector.extract_strided_slice %0 {offsets = [0, 0], sizes = [4, 128], strides = [1, 1]} : vector<12x128xf32> to vector<4x128xf32>
    %2 = vector.extract_strided_slice %0 {offsets = [4, 0], sizes = [1, 128], strides = [1, 1]} : vector<12x128xf32> to vector<1x128xf32>
    %3 = vector.extract_strided_slice %0 {offsets = [5, 0], sizes = [6, 128], strides = [1, 1]} : vector<12x128xf32> to vector<6x128xf32>
    %4 = vector.extract_strided_slice %0 {offsets = [11, 0], sizes = [1, 128], strides = [1, 1]} : vector<12x128xf32> to vector<1x128xf32>
    %c0_1 = arith.constant 0 : index
    %c0_2 = arith.constant 0 : index
    %c0_3 = arith.constant 0 : index
    %c0_4 = arith.constant 0 : index
    %5 = vector.load %arg1[%c0_1, %c0_2, %c0_3, %c0_4] : memref<1x4x16x16xf32, #tpu.memory_space<vmem>>, vector<1x1x16x16xf32>
    %6 = vector.shape_cast %5 : vector<1x1x16x16xf32> to vector<16x16xf32>
    %7 = tpu.concatenate %6, %6, %6, %6, %6, %6, %6, %6 in 1 : vector<16x16xf32>, vector<16x16xf32>, vector<16x16xf32>, vector<16x16xf32>, vector<16x16xf32>, vector<16x16xf32>, vector<16x16xf32>, vector<16x16xf32> -> vector<16x128xf32>
    %8 = vector.extract_strided_slice %1 {offsets = [0, 0], sizes = [1, 128], strides = [1, 1]} : vector<4x128xf32> to vector<1x128xf32>
    %9 = vector.broadcast %8 : vector<1x128xf32> to vector<16x128xf32>
    %10 = arith.mulf %7, %9 : vector<16x128xf32>
    %c0_5 = arith.constant 0 : index
    %c1 = arith.constant 1 : index
    %c0_6 = arith.constant 0 : index
    %c0_7 = arith.constant 0 : index
    %11 = vector.load %arg1[%c0_5, %c1, %c0_6, %c0_7] : memref<1x4x16x16xf32, #tpu.memory_space<vmem>>, vector<1x1x16x16xf32>
    %12 = vector.shape_cast %11 : vector<1x1x16x16xf32> to vector<16x16xf32>
    %13 = tpu.concatenate %12, %12, %12, %12, %12, %12, %12, %12 in 1 : vector<16x16xf32>, vector<16x16xf32>, vector<16x16xf32>, vector<16x16xf32>, vector<16x16xf32>, vector<16x16xf32>, vector<16x16xf32>, vector<16x16xf32> -> vector<16x128xf32>
    %14 = vector.extract_strided_slice %1 {offsets = [1, 0], sizes = [1, 128], strides = [1, 1]} : vector<4x128xf32> to vector<1x128xf32>
    %15 = vector.broadcast %14 : vector<1x128xf32> to vector<16x128xf32>
    %16 = arith.mulf %13, %15 : vector<16x128xf32>
    %17 = arith.addf %10, %16 : vector<16x128xf32>
    %c0_8 = arith.constant 0 : index
    %c2 = arith.constant 2 : index
    %c0_9 = arith.constant 0 : index
    %c0_10 = arith.constant 0 : index
    %18 = vector.load %arg1[%c0_8, %c2, %c0_9, %c0_10] : memref<1x4x16x16xf32, #tpu.memory_space<vmem>>, vector<1x1x16x16xf32>
    %19 = vector.shape_cast %18 : vector<1x1x16x16xf32> to vector<16x16xf32>
    %20 = tpu.concatenate %19, %19, %19, %19, %19, %19, %19, %19 in 1 : vector<16x16xf32>, vector<16x16xf32>, vector<16x16xf32>, vector<16x16xf32>, vector<16x16xf32>, vector<16x16xf32>, vector<16x16xf32>, vector<16x16xf32> -> vector<16x128xf32>
    %21 = vector.extract_strided_slice %1 {offsets = [2, 0], sizes = [1, 128], strides = [1, 1]} : vector<4x128xf32> to vector<1x128xf32>
    %22 = vector.broadcast %21 : vector<1x128xf32> to vector<16x128xf32>
    %23 = arith.mulf %20, %22 : vector<16x128xf32>
    %24 = arith.addf %17, %23 : vector<16x128xf32>
    %c0_11 = arith.constant 0 : index
    %c3 = arith.constant 3 : index
    %c0_12 = arith.constant 0 : index
    %c0_13 = arith.constant 0 : index
    %25 = vector.load %arg1[%c0_11, %c3, %c0_12, %c0_13] : memref<1x4x16x16xf32, #tpu.memory_space<vmem>>, vector<1x1x16x16xf32>
    %26 = vector.shape_cast %25 : vector<1x1x16x16xf32> to vector<16x16xf32>
    %27 = tpu.concatenate %26, %26, %26, %26, %26, %26, %26, %26 in 1 : vector<16x16xf32>, vector<16x16xf32>, vector<16x16xf32>, vector<16x16xf32>, vector<16x16xf32>, vector<16x16xf32>, vector<16x16xf32>, vector<16x16xf32> -> vector<16x128xf32>
    %28 = vector.extract_strided_slice %1 {offsets = [3, 0], sizes = [1, 128], strides = [1, 1]} : vector<4x128xf32> to vector<1x128xf32>
    %29 = vector.broadcast %28 : vector<1x128xf32> to vector<16x128xf32>
    %30 = arith.mulf %27, %29 : vector<16x128xf32>
    %31 = arith.addf %24, %30 : vector<16x128xf32>
    %32 = vector.broadcast %2 : vector<1x128xf32> to vector<16x128xf32>
    %33 = arith.addf %31, %32 : vector<16x128xf32>
    %cst = arith.constant 0.000000e+00 : f32
    %34 = vector.broadcast %cst : f32 to vector<17x130xf32>
    %c0_14 = arith.constant 0 : index
    %c0_15 = arith.constant 0 : index
    %35 = vector.load %arg4[%c0_14, %c0_15] : memref<17x130xf32, #tpu.memory_space<vmem>>, vector<17x130xf32>
    tpu.vector_store %arg4[%c0_14, %c0_15], %34 {strides = array<i32>} : memref<17x130xf32, #tpu.memory_space<vmem>>, vector<17x130xf32>,
    %c1_16 = arith.constant 1 : index
    %c1_17 = arith.constant 1 : index
    %36 = vector.load %arg4[%c1_16, %c1_17] : memref<17x130xf32, #tpu.memory_space<vmem>>, vector<16x128xf32>
    tpu.vector_store %arg4[%c1_16, %c1_17], %33 {strides = array<i32>} : memref<17x130xf32, #tpu.memory_space<vmem>>, vector<16x128xf32>,
    %c0_18 = arith.constant 0 : index
    %c0_19 = arith.constant 0 : index
    %37 = vector.load %arg4[%c0_18, %c0_19] : memref<17x130xf32, #tpu.memory_space<vmem>>, vector<16x128xf32>
    %38 = vector.extract_strided_slice %3 {offsets = [0, 0], sizes = [1, 128], strides = [1, 1]} : vector<6x128xf32> to vector<1x128xf32>
    %39 = vector.broadcast %38 : vector<1x128xf32> to vector<16x128xf32>
    %40 = arith.mulf %37, %39 : vector<16x128xf32>
    %c0_20 = arith.constant 0 : index
    %c1_21 = arith.constant 1 : index
    %41 = vector.load %arg4[%c0_20, %c1_21] : memref<17x130xf32, #tpu.memory_space<vmem>>, vector<16x128xf32>
    %42 = vector.extract_strided_slice %3 {offsets = [1, 0], sizes = [1, 128], strides = [1, 1]} : vector<6x128xf32> to vector<1x128xf32>
    %43 = vector.broadcast %42 : vector<1x128xf32> to vector<16x128xf32>
    %44 = arith.mulf %41, %43 : vector<16x128xf32>
    %45 = arith.addf %40, %44 : vector<16x128xf32>
    %c0_22 = arith.constant 0 : index
    %c2_23 = arith.constant 2 : index
    %46 = vector.load %arg4[%c0_22, %c2_23] : memref<17x130xf32, #tpu.memory_space<vmem>>, vector<16x128xf32>
    %47 = vector.extract_strided_slice %3 {offsets = [2, 0], sizes = [1, 128], strides = [1, 1]} : vector<6x128xf32> to vector<1x128xf32>
    %48 = vector.broadcast %47 : vector<1x128xf32> to vector<16x128xf32>
    %49 = arith.mulf %46, %48 : vector<16x128xf32>
    %50 = arith.addf %45, %49 : vector<16x128xf32>
    %c1_24 = arith.constant 1 : index
    %c0_25 = arith.constant 0 : index
    %51 = vector.load %arg4[%c1_24, %c0_25] : memref<17x130xf32, #tpu.memory_space<vmem>>, vector<16x128xf32>
    %52 = vector.extract_strided_slice %3 {offsets = [3, 0], sizes = [1, 128], strides = [1, 1]} : vector<6x128xf32> to vector<1x128xf32>
    %53 = vector.broadcast %52 : vector<1x128xf32> to vector<16x128xf32>
    %54 = arith.mulf %51, %53 : vector<16x128xf32>
    %55 = arith.addf %50, %54 : vector<16x128xf32>
    %56 = vector.extract_strided_slice %3 {offsets = [4, 0], sizes = [1, 128], strides = [1, 1]} : vector<6x128xf32> to vector<1x128xf32>
    %57 = vector.broadcast %56 : vector<1x128xf32> to vector<16x128xf32>
    %58 = arith.mulf %33, %57 : vector<16x128xf32>
    %59 = arith.addf %55, %58 : vector<16x128xf32>
    %c1_26 = arith.constant 1 : index
    %c2_27 = arith.constant 2 : index
    %60 = vector.load %arg4[%c1_26, %c2_27] : memref<17x130xf32, #tpu.memory_space<vmem>>, vector<16x128xf32>
    %61 = vector.extract_strided_slice %3 {offsets = [5, 0], sizes = [1, 128], strides = [1, 1]} : vector<6x128xf32> to vector<1x128xf32>
    %62 = vector.broadcast %61 : vector<1x128xf32> to vector<16x128xf32>
    %63 = arith.mulf %60, %62 : vector<16x128xf32>
    %64 = arith.addf %59, %63 : vector<16x128xf32>
    %65 = vector.broadcast %4 : vector<1x128xf32> to vector<16x128xf32>
    %66 = arith.addf %64, %65 : vector<16x128xf32>
    %c0_28 = arith.constant 0 : index
    %c0_29 = arith.constant 0 : index
    %c0_30 = arith.constant 0 : index
    %67 = vector.load %arg3[%c0_28, %c0_29, %c0_30] : memref<1x16x128xf32, #tpu.memory_space<vmem>>, vector<1x16x128xf32>
    %68 = vector.shape_cast %67 : vector<1x16x128xf32> to vector<16x128xf32>
    %69 = vector.shape_cast %66 : vector<16x128xf32> to vector<1x16x128xf32>
    tpu.vector_store %arg3[%c0_28, %c0_29, %c0_30], %69 {strides = array<i32>} : memref<1x16x128xf32, #tpu.memory_space<vmem>>, vector<1x16x128xf32>,
    return
  }
  func.func @transform_0(%arg0: i32) -> (i32, i32, i32, i32) {
    %c0_i32 = arith.constant 0 : i32
    %c0_i32_0 = arith.constant 0 : i32
    %c0_i32_1 = arith.constant 0 : i32
    %c0_i32_2 = arith.constant 0 : i32
    return %arg0, %c0_i32, %c0_i32_0, %c0_i32_1 : i32, i32, i32, i32
  }
  func.func @transform_1(%arg0: i32) -> (i32, i32) {
    %c0_i32 = arith.constant 0 : i32
    %c0_i32_0 = arith.constant 0 : i32
    %c0_i32_1 = arith.constant 0 : i32
    return %c0_i32, %c0_i32_0 : i32, i32
  }
  func.func @transform_2(%arg0: i32) -> (i32, i32, i32) {
    %c0_i32 = arith.constant 0 : i32
    %c0_i32_0 = arith.constant 0 : i32
    %c0_i32_1 = arith.constant 0 : i32
    return %arg0, %c0_i32, %c0_i32_0 : i32, i32, i32
  }
}

</mosaic_0001>

<llo_original>
// kernel: depth_sep_conv2d.1
$region0: #{depth_sep_conv2d.1}
  #allocation0 [shape = 'u32[]', space=smem, size = 0x4, offset = 0x4, fixed_abs, tag = 'smem constant byte address 0x4 - core index']
  #allocation1 [shape = 'u32[72,128]{1,0:T(1,128)}', space=vmem, size = 0x9000, scoped, tag = 'internal scratch']
  #allocation2 [shape = 'f32[17,130]{1,0:T(8,128)}', space=vmem, size = 0x6000, scoped, tag = 'scratch operand']
  %s0 = inlined_call_operand.vmem [shape: f32[2,4,16,16], index: 0, kind: input, shape index: {}]
  %s1 = inlined_call_operand.vmem [shape: f32[12,128], index: 1, kind: input, shape index: {}]
  %s2 = inlined_call_operand.vmem [shape: f32[2,16,128], index: 2, kind: output, shape index: {}]
  %s3 = sld [smem:[#allocation0]]
  $region41: #{depth_sep_conv2d.1} parent=0
    _
  %s5 = ssub.s32 1, %s3
  %s6 = scalar_select 0, %s5, %s3
  loop: start=0, step=1, limit=4
  $region2: #{depth_sep_conv2d.1} parent=0 // loop_pre_header
    _
  $region3: #{depth_sep_conv2d.1} parent=0 // loop_header
    %s8 = sphi 0, %s12
    %p9 = scmp.ge.s32.totalorder %s8, 4
    %s18 = sphi 0, %s20
    %s21 = sphi 0, %s18
    %s22 = sphi 0, %s21
    %s38 = sphi 0, %s22
    %s42 = sphi 0, %s42
    %s44 = sphi 0, %s42
    %s45 = sphi 0, %s44
    %s59 = sphi 0, %s45
    %s65 = sphi 0, %s67
    %s68 = sphi 0, %s65
    %s69 = sphi 0, %s68
    %s85 = sphi 0, %s69
  $region4: #{depth_sep_conv2d.1} parent=0 // loop_header_branch
    %11 = sbr.rel (%p9) target = $region8
  $region5: #{depth_sep_conv2d.1} parent=0 // loop_body
    %s13 = ssub.s32 %s8, 1
    %s14 = ssub.s32 %s8, 2
    %s15 = sadd.s32 %s8, 1
    %s16 = ssub.s32 %s8, %s15
    %p17 = scmp.eq.s32.totalorder %s16, 0
    %s19 = sadd.s32 %s18, 1
    %s20 = scalar_select %p17, %s18, %s19
    %p23 = pneg %p17
    %p24 = scmp.eq.s32.totalorder %s8, 1
    %p25 = por %p23, %p24
    %p26 = scmp.ne.s32.totalorder %s18, %s21
    %p27 = scmp.eq.s32.totalorder %s8, 0
    %p28 = por %p26, %p27
    %p29 = scmp.ne.s32.totalorder %s18, %s21
    %p30 = scmp.eq.s32.totalorder %s13, 1
    %p31 = por %p29, %p30
    %p32 = scmp.ne.s32.totalorder %s21, %s22
    %p33 = scmp.eq.s32.totalorder %s13, 0
    %p34 = por %p32, %p33
    %p35 = scmp.ne.s32.totalorder %s21, %s22
    %p36 = scmp.eq.s32.totalorder %s14, 1
    %p37 = por %p35, %p36
    %p39 = scmp.ne.s32.totalorder %s22, %s38
    %p40 = scmp.eq.s32.totalorder %s14, 0
    %p41 = por %p39, %p40
    %s43 = sadd.s32 %s42, 1
    %p46 = scmp.eq.s32.totalorder %s8, 1
    %p47 = scmp.ne.s32.totalorder %s42, %s44
    %p48 = scmp.eq.s32.totalorder %s8, 0
    %p49 = por %p47, %p48
    %p50 = scmp.ne.s32.totalorder %s42, %s44
    %p51 = scmp.eq.s32.totalorder %s13, 1
    %p52 = por %p50, %p51
    %p53 = scmp.ne.s32.totalorder %s44, %s45
    %p54 = scmp.eq.s32.totalorder %s13, 0
    %p55 = por %p53, %p54
    %p56 = scmp.ne.s32.totalorder %s44, %s45
    %p57 = scmp.eq.s32.totalorder %s14, 1
    %p58 = por %p56, %p57
    %p60 = scmp.ne.s32.totalorder %s45, %s59
    %p61 = scmp.eq.s32.totalorder %s14, 0
    %p62 = por %p60, %p61
    %s63 = ssub.s32 %s8, %s15
    %p64 = scmp.eq.s32.totalorder %s63, 0
    %s66 = sadd.s32 %s65, 1
    %s67 = scalar_select %p64, %s65, %s66
    %p70 = pneg %p64
    %p71 = scmp.eq.s32.totalorder %s8, 1
    %p72 = por %p70, %p71
    %p73 = scmp.ne.s32.totalorder %s65, %s68
    %p74 = scmp.eq.s32.totalorder %s8, 0
    %p75 = por %p73, %p74
    %p76 = scmp.ne.s32.totalorder %s65, %s68
    %p77 = scmp.eq.s32.totalorder %s13, 1
    %p78 = por %p76, %p77
    %p79 = scmp.ne.s32.totalorder %s68, %s69
    %p80 = scmp.eq.s32.totalorder %s13, 0
    %p81 = por %p79, %p80
    %p82 = scmp.ne.s32.totalorder %s68, %s69
    %p83 = scmp.eq.s32.totalorder %s14, 1
    %p84 = por %p82, %p83
    %p86 = scmp.ne.s32.totalorder %s69, %s85
    %p87 = scmp.eq.s32.totalorder %s14, 0
    %p88 = por %p86, %p87
    %p89 = scmp.le.s32.totalorder 1, %s8
    %p90 = scmp.lt.s32.totalorder %s8, 3
    %p91 = pnand %p89, %p90
    %p92 = pneg %p91
    // Predicated region
    $region9: #{depth_sep_conv2d.1} parent=5 // pred_check
      _
    $region10: #{depth_sep_conv2d.1} parent=5 // pred_check_branch
      %94 = sbr.rel (%p91) target = $region12
    $region11: #{depth_sep_conv2d.1} parent=5 // pred_region
      %s95 = ssub.s32 %s8, 1
      // Predicated region
      $region13: #{depth_sep_conv2d.1} parent=11 // pred_check
        %p96 = pneg %p55
      $region14: #{depth_sep_conv2d.1} parent=11 // pred_check_branch
        %98 = sbr.rel (%p96) target = $region16
      $region15: #{depth_sep_conv2d.1} parent=11 // pred_region
        _
      $region16: #{depth_sep_conv2d.1} parent=11 // pred_fallthru
        _
    $region12: #{depth_sep_conv2d.1} parent=5 // pred_fallthru
      _
    %p99 = scmp.lt.s32.totalorder %s8, 2
    // Predicated region
    $region17: #{depth_sep_conv2d.1} parent=5 // pred_check
      %p100 = pneg %p99
    $region18: #{depth_sep_conv2d.1} parent=5 // pred_check_branch
      %102 = sbr.rel (%p100) target = $region20
    $region19: #{depth_sep_conv2d.1} parent=5 // pred_region
      // Predicated region
      $region21: #{depth_sep_conv2d.1} parent=19 // pred_check
        %p103 = pneg %p28
      $region22: #{depth_sep_conv2d.1} parent=19 // pred_check_branch
        %105 = sbr.rel (%p103) target = $region24
      $region23: #{depth_sep_conv2d.1} parent=19 // pred_region
        %p106 = scmp.lt.s32.totalorder %s8, 1
        %s107 = scalar_select %p106, %s8, 1
        %s108 = smul.addr %s107, 8
        %s109 = smul.addr %s108, 8
        %s110 = scalar_lea.vmem %s0, %s109
      $region24: #{depth_sep_conv2d.1} parent=19 // pred_fallthru
        _
    $region20: #{depth_sep_conv2d.1} parent=5 // pred_fallthru
      _
    %p111 = scmp.le.s32.totalorder 1, %s8
    %p112 = scmp.lt.s32.totalorder %s8, 3
    %p113 = pnand %p111, %p112
    %p114 = pneg %p113
    // Predicated region
    $region25: #{depth_sep_conv2d.1} parent=5 // pred_check
      _
    $region26: #{depth_sep_conv2d.1} parent=5 // pred_check_branch
      %116 = sbr.rel (%p113) target = $region28
    $region27: #{depth_sep_conv2d.1} parent=5 // pred_region
      %s117 = ssub.s32 %s8, 1
      %p118 = scmp.lt.s32.totalorder %s13, 1
      %s119 = scalar_select %p118, %s13, 1
      %s120 = smul.addr %s119, 8
      %s121 = smul.addr %s120, 8
      %s122 = scalar_lea.vmem %s0, %s121
      %p123 = pneg %p34
      %p124 = pneg %p31
      %p125 = pneg %p55
      %p126 = pneg %p52
      %p127 = pneg %p81
      %p128 = pneg %p78
      %p129 = scmp.lt.s32.totalorder %s13, 1
      %s130 = scalar_select %p129, %s13, 1
      %s131 = smul.addr %s130, 2
      %s132 = smul.addr %s131, 8
      %s133 = scalar_lea.vmem %s2, %s132
      %p134 = scmp.lt.s32.totalorder %s13, 1
      %s135 = scalar_select %p134, %s13, 1
      %s136 = smul.addr %s135, 8
      %s137 = smul.addr %s136, 8
      %s138 = scalar_lea.vmem %s0, %s137
      %p139 = scmp.lt.s32.totalorder %s13, 1
      %s140 = scalar_select %p139, %s13, 1
      %s141 = smul.addr %s140, 2
      %s142 = smul.addr %s141, 8
      %s143 = scalar_lea.vmem %s2, %s142
      %v144 = vld [vmem:[%s1] sm:$0xff]
      %v145 = vld [vmem:[%s1 + $0x8] sm:$0xf]
      %v146 = vld [vmem:[%s138] sm:$0xff]
      %v147 = vld [vmem:[%s138 + $0x8] sm:$0xff]
      %150 = vrot.lane.b32.xlu0 %v146, 16
      %v151 = vpop.permute.xlu0 %150
      %152 = vrot.lane.b32.xlu0 %v147, 16
      %v153 = vpop.permute.xlu0 %152
      %156 = vrot.lane.b32.xlu0 %v146, 32
      %v157 = vpop.permute.xlu0 %156
      %158 = vrot.lane.b32.xlu0 %v147, 32
      %v159 = vpop.permute.xlu0 %158
      %162 = vrot.lane.b32.xlu0 %v146, 48
      %v163 = vpop.permute.xlu0 %162
      %164 = vrot.lane.b32.xlu0 %v147, 48
      %v165 = vpop.permute.xlu0 %164
      %168 = vrot.lane.b32.xlu0 %v146, 64
      %v169 = vpop.permute.xlu0 %168
      %170 = vrot.lane.b32.xlu0 %v147, 64
      %v171 = vpop.permute.xlu0 %170
      %174 = vrot.lane.b32.xlu0 %v146, 80
      %v175 = vpop.permute.xlu0 %174
      %176 = vrot.lane.b32.xlu0 %v147, 80
      %v177 = vpop.permute.xlu0 %176
      %180 = vrot.lane.b32.xlu0 %v146, 96
      %v181 = vpop.permute.xlu0 %180
      %182 = vrot.lane.b32.xlu0 %v147, 96
      %v183 = vpop.permute.xlu0 %182
      %186 = vrot.lane.b32.xlu0 %v146, 112
      %v187 = vpop.permute.xlu0 %186
      %188 = vrot.lane.b32.xlu0 %v147, 112
      %v189 = vpop.permute.xlu0 %188
      %vm192 = vcmask 130048
      %v193 = vsel %vm192, %v146, %v151
      %v194 = vsel %vm192, %v147, %v153
      %vm195 = vcmask 261120
      %v196 = vsel %vm195, %v193, %v157
      %v197 = vsel %vm195, %v194, %v159
      %vm198 = vcmask 392192
      %v199 = vsel %vm198, %v196, %v163
      %v200 = vsel %vm198, %v197, %v165
      %vm201 = vcmask 523264
      %v202 = vsel %vm201, %v199, %v169
      %v203 = vsel %vm201, %v200, %v171
      %vm204 = vcmask 654336
      %v205 = vsel %vm204, %v202, %v175
      %v206 = vsel %vm204, %v203, %v177
      %vm207 = vcmask 785408
      %v208 = vsel %vm207, %v205, %v181
      %v209 = vsel %vm207, %v206, %v183
      %vm210 = vcmask 916480
      %v211 = vsel %vm210, %v208, %v187
      %v212 = vsel %vm210, %v209, %v189
      %v213 = vperm.slane %v144, 0
      %v214 = vmul.f32 %v211, %v213
      %v215 = vmul.f32 %v212, %v213
      %s216 = scalar_lea.vmem %s138, 16
      %v217 = vld [vmem:[%s216] sm:$0xff]
      %v218 = vld [vmem:[%s216 + $0x8] sm:$0xff]
      %221 = vrot.lane.b32.xlu0 %v217, 16
      %v222 = vpop.permute.xlu0 %221
      %223 = vrot.lane.b32.xlu0 %v218, 16
      %v224 = vpop.permute.xlu0 %223
      %227 = vrot.lane.b32.xlu0 %v217, 32
      %v228 = vpop.permute.xlu0 %227
      %229 = vrot.lane.b32.xlu0 %v218, 32
      %v230 = vpop.permute.xlu0 %229
      %233 = vrot.lane.b32.xlu0 %v217, 48
      %v234 = vpop.permute.xlu0 %233
      %235 = vrot.lane.b32.xlu0 %v218, 48
      %v236 = vpop.permute.xlu0 %235
      %239 = vrot.lane.b32.xlu0 %v217, 64
      %v240 = vpop.permute.xlu0 %239
      %241 = vrot.lane.b32.xlu0 %v218, 64
      %v242 = vpop.permute.xlu0 %241
      %245 = vrot.lane.b32.xlu0 %v217, 80
      %v246 = vpop.permute.xlu0 %245
      %247 = vrot.lane.b32.xlu0 %v218, 80
      %v248 = vpop.permute.xlu0 %247
      %251 = vrot.lane.b32.xlu0 %v217, 96
      %v252 = vpop.permute.xlu0 %251
      %253 = vrot.lane.b32.xlu0 %v218, 96
      %v254 = vpop.permute.xlu0 %253
      %257 = vrot.lane.b32.xlu0 %v217, 112
      %v258 = vpop.permute.xlu0 %257
      %259 = vrot.lane.b32.xlu0 %v218, 112
      %v260 = vpop.permute.xlu0 %259
      %v263 = vsel %vm192, %v217, %v222
      %v264 = vsel %vm192, %v218, %v224
      %v265 = vsel %vm195, %v263, %v228
      %v266 = vsel %vm195, %v264, %v230
      %v267 = vsel %vm198, %v265, %v234
      %v268 = vsel %vm198, %v266, %v236
      %v269 = vsel %vm201, %v267, %v240
      %v270 = vsel %vm201, %v268, %v242
      %v271 = vsel %vm204, %v269, %v246
      %v272 = vsel %vm204, %v270, %v248
      %v273 = vsel %vm207, %v271, %v252
      %v274 = vsel %vm207, %v272, %v254
      %v275 = vsel %vm210, %v273, %v258
      %v276 = vsel %vm210, %v274, %v260
      %v277 = vperm.slane %v144, 1
      %v278 = vmul.f32 %v275, %v277
      %v279 = vmul.f32 %v276, %v277
      %v280 = vadd.f32 %v214, %v278
      %v281 = vadd.f32 %v215, %v279
      %s282 = scalar_lea.vmem %s138, 32
      %v283 = vld [vmem:[%s282] sm:$0xff]
      %v284 = vld [vmem:[%s282 + $0x8] sm:$0xff]
      %287 = vrot.lane.b32.xlu0 %v283, 16
      %v288 = vpop.permute.xlu0 %287
      %289 = vrot.lane.b32.xlu0 %v284, 16
      %v290 = vpop.permute.xlu0 %289
      %293 = vrot.lane.b32.xlu0 %v283, 32
      %v294 = vpop.permute.xlu0 %293
      %295 = vrot.lane.b32.xlu0 %v284, 32
      %v296 = vpop.permute.xlu0 %295
      %299 = vrot.lane.b32.xlu0 %v283, 48
      %v300 = vpop.permute.xlu0 %299
      %301 = vrot.lane.b32.xlu0 %v284, 48
      %v302 = vpop.permute.xlu0 %301
      %305 = vrot.lane.b32.xlu0 %v283, 64
      %v306 = vpop.permute.xlu0 %305
      %307 = vrot.lane.b32.xlu0 %v284, 64
      %v308 = vpop.permute.xlu0 %307
      %311 = vrot.lane.b32.xlu0 %v283, 80
      %v312 = vpop.permute.xlu0 %311
      %313 = vrot.lane.b32.xlu0 %v284, 80
      %v314 = vpop.permute.xlu0 %313
      %317 = vrot.lane.b32.xlu0 %v283, 96
      %v318 = vpop.permute.xlu0 %317
      %319 = vrot.lane.b32.xlu0 %v284, 96
      %v320 = vpop.permute.xlu0 %319
      %323 = vrot.lane.b32.xlu0 %v283, 112
      %v324 = vpop.permute.xlu0 %323
      %325 = vrot.lane.b32.xlu0 %v284, 112
      %v326 = vpop.permute.xlu0 %325
      %v329 = vsel %vm192, %v283, %v288
      %v330 = vsel %vm192, %v284, %v290
      %v331 = vsel %vm195, %v329, %v294
      %v332 = vsel %vm195, %v330, %v296
      %v333 = vsel %vm198, %v331, %v300
      %v334 = vsel %vm198, %v332, %v302
      %v335 = vsel %vm201, %v333, %v306
      %v336 = vsel %vm201, %v334, %v308
      %v337 = vsel %vm204, %v335, %v312
      %v338 = vsel %vm204, %v336, %v314
      %v339 = vsel %vm207, %v337, %v318
      %v340 = vsel %vm207, %v338, %v320
      %v341 = vsel %vm210, %v339, %v324
      %v342 = vsel %vm210, %v340, %v326
      %v343 = vperm.slane %v144, 2
      %v344 = vmul.f32 %v341, %v343
      %v345 = vmul.f32 %v342, %v343
      %v346 = vadd.f32 %v280, %v344
      %v347 = vadd.f32 %v281, %v345
      %s348 = scalar_lea.vmem %s138, 48
      %v349 = vld [vmem:[%s348] sm:$0xff]
      %v350 = vld [vmem:[%s348 + $0x8] sm:$0xff]
      %353 = vrot.lane.b32.xlu0 %v349, 16
      %v354 = vpop.permute.xlu0 %353
      %355 = vrot.lane.b32.xlu0 %v350, 16
      %v356 = vpop.permute.xlu0 %355
      %359 = vrot.lane.b32.xlu0 %v349, 32
      %v360 = vpop.permute.xlu0 %359
      %361 = vrot.lane.b32.xlu0 %v350, 32
      %v362 = vpop.permute.xlu0 %361
      %365 = vrot.lane.b32.xlu0 %v349, 48
      %v366 = vpop.permute.xlu0 %365
      %367 = vrot.lane.b32.xlu0 %v350, 48
      %v368 = vpop.permute.xlu0 %367
      %371 = vrot.lane.b32.xlu0 %v349, 64
      %v372 = vpop.permute.xlu0 %371
      %373 = vrot.lane.b32.xlu0 %v350, 64
      %v374 = vpop.permute.xlu0 %373
      %377 = vrot.lane.b32.xlu0 %v349, 80
      %v378 = vpop.permute.xlu0 %377
      %379 = vrot.lane.b32.xlu0 %v350, 80
      %v380 = vpop.permute.xlu0 %379
      %383 = vrot.lane.b32.xlu0 %v349, 96
      %v384 = vpop.permute.xlu0 %383
      %385 = vrot.lane.b32.xlu0 %v350, 96
      %v386 = vpop.permute.xlu0 %385
      %389 = vrot.lane.b32.xlu0 %v349, 112
      %v390 = vpop.permute.xlu0 %389
      %391 = vrot.lane.b32.xlu0 %v350, 112
      %v392 = vpop.permute.xlu0 %391
      %v395 = vsel %vm192, %v349, %v354
      %v396 = vsel %vm192, %v350, %v356
      %v397 = vsel %vm195, %v395, %v360
      %v398 = vsel %vm195, %v396, %v362
      %v399 = vsel %vm198, %v397, %v366
      %v400 = vsel %vm198, %v398, %v368
      %v401 = vsel %vm201, %v399, %v372
      %v402 = vsel %vm201, %v400, %v374
      %v403 = vsel %vm204, %v401, %v378
      %v404 = vsel %vm204, %v402, %v380
      %v405 = vsel %vm207, %v403, %v384
      %v406 = vsel %vm207, %v404, %v386
      %v407 = vsel %vm210, %v405, %v390
      %v408 = vsel %vm210, %v406, %v392
      %v409 = vperm.slane %v144, 3
      %v410 = vmul.f32 %v407, %v409
      %v411 = vmul.f32 %v408, %v409
      %v412 = vadd.f32 %v346, %v410
      %v413 = vadd.f32 %v347, %v411
      %v414 = vperm.slane %v144, 4
      %v415 = vadd.f32 %v412, %v414
      %v416 = vadd.f32 %v413, %v414
      %417 = vst [vmem:[#allocation2] sm:$0xff] 0.0
      %vm418 = vcmask 15360
      %419 = vst.msk [vmem:[#allocation2 + $0x8] sm:$0xff] %vm418, 0.0
      %420 = vst [vmem:[#allocation2 + $0x10] sm:$0xff] 0.0
      %421 = vst.msk [vmem:[#allocation2 + $0x18] sm:$0xff] %vm418, 0.0
      %422 = vst [vmem:[#allocation2 + $0x20] sm:$0x1] 0.0
      %vm423 = vcmask 8192
      %424 = vst.msk [vmem:[#allocation2 + $0x28] sm:$0x1] %vm423, 0.0
      %vm427 = vcmask 1040384
      %v428 = vrot.slane %v415, 7
      %v429 = vrot.slane %v416, 7
      %v430 = vsel %vm427, %v428, %v429
      %431 = vrot.lane.b32.xlu0 %v428, 1
      %v432 = vpop.permute.xlu0 %431
      %433 = vrot.lane.b32.xlu0 %v430, 1
      %v434 = vpop.permute.xlu0 %433
      %435 = vrot.lane.b32.xlu0 %v429, 1
      %v436 = vpop.permute.xlu0 %435
      %vm440 = vcmask 1047561
      %441 = vst.msk [vmem:[#allocation2] sm:$0xfe] %vm440, %v432
      %vm442 = vcmask 7169
      %443 = vst.msk [vmem:[#allocation2 + $0x8] sm:$0xfe] %vm442, %v432
      %vm444 = vcmask 1047560
      %445 = vst.msk [vmem:[#allocation2 + $0x10] sm:$0xff] %vm444, %v434
      %vm446 = vcmask 7168
      %447 = vst.msk [vmem:[#allocation2 + $0x18] sm:$0xff] %vm446, %v434
      %vm448 = vcmask 1040392
      %449 = vst.msk [vmem:[#allocation2 + $0x20] sm:$0x1] %vm448, %v436
      %vm450 = vcmask 0
      %451 = vst.msk [vmem:[#allocation2 + $0x28] sm:$0x1] %vm450, %v436
      %v452 = vld [vmem:[#allocation2] sm:$0xff]
      %v453 = vld [vmem:[#allocation2 + $0x10] sm:$0xff]
      %v454 = vperm.slane %v144, 5
      %v455 = vmul.f32 %v452, %v454
      %v456 = vmul.f32 %v453, %v454
      %v457 = vld [vmem:[#allocation2 + $0x8] sm:$0xff]
      %v458 = vld [vmem:[#allocation2 + $0x18] sm:$0xff]
      %v459 = vperm.slane %v144, 6
      %461 = vrot.lane.b32.xlu0 %v459, 1
      %v462 = vpop.permute.xlu0 %461
      %v464 = vmul.f32 %v452, %v462
      %v465 = vmul.f32 %v457, %v462
      %v466 = vmul.f32 %v453, %v462
      %v467 = vmul.f32 %v458, %v462
      %472 = vrot.lane.b32.xlu0 %v464, 127
      %v473 = vpop.permute.xlu0 %472
      %474 = vrot.lane.b32.xlu0 %v465, 127
      %v475 = vpop.permute.xlu0 %474
      %476 = vrot.lane.b32.xlu0 %v466, 127
      %v477 = vpop.permute.xlu0 %476
      %478 = vrot.lane.b32.xlu0 %v467, 127
      %v479 = vpop.permute.xlu0 %478
      %vm480 = vcmask 1039360
      %v481 = vsel %vm480, %v473, %v475
      %v482 = vsel %vm480, %v477, %v479
      %v485 = vadd.f32 %v455, %v481
      %v486 = vadd.f32 %v456, %v482
      %v487 = vperm.slane %v144, 7
      %489 = vrot.lane.b32.xlu0 %v487, 2
      %v490 = vpop.permute.xlu0 %489
      %v492 = vmul.f32 %v452, %v490
      %v493 = vmul.f32 %v457, %v490
      %v494 = vmul.f32 %v453, %v490
      %v495 = vmul.f32 %v458, %v490
      %500 = vrot.lane.b32.xlu0 %v492, 126
      %v501 = vpop.permute.xlu0 %500
      %502 = vrot.lane.b32.xlu0 %v493, 126
      %v503 = vpop.permute.xlu0 %502
      %504 = vrot.lane.b32.xlu0 %v494, 126
      %v505 = vpop.permute.xlu0 %504
      %506 = vrot.lane.b32.xlu0 %v495, 126
      %v507 = vpop.permute.xlu0 %506
      %vm508 = vcmask 1031168
      %v509 = vsel %vm508, %v501, %v503
      %v510 = vsel %vm508, %v505, %v507
      %v513 = vadd.f32 %v485, %v509
      %v514 = vadd.f32 %v486, %v510
      %v515 = vld [vmem:[#allocation2] sm:$0xfe]
      %v516 = vld [vmem:[#allocation2 + $0x20] sm:$0x1]
      %v517 = vperm.slane %v145, 0
      %v518 = vmul.f32 %v515, %v517
      %v519 = vmul.f32 %v453, %v517
      %v520 = vmul.f32 %v516, %v517
      %vm524 = vcmask 1046528
      %v525 = vrot.slane %v518, 1
      %v526 = vrot.slane %v519, 1
      %v527 = vsel %vm524, %v525, %v526
      %v528 = vrot.slane %v520, 1
      %v529 = vsel %vm524, %v526, %v528
      %v532 = vadd.f32 %v513, %v527
      %v533 = vadd.f32 %v514, %v529
      %v534 = vperm.slane %v145, 1
      %v535 = vmul.f32 %v415, %v534
      %v536 = vmul.f32 %v416, %v534
      %v537 = vadd.f32 %v532, %v535
      %v538 = vadd.f32 %v533, %v536
      %v539 = vld [vmem:[#allocation2 + $0x8] sm:$0xfe]
      %v540 = vld [vmem:[#allocation2 + $0x28] sm:$0x1]
      %v541 = vperm.slane %v145, 2
      %543 = vrot.lane.b32.xlu0 %v541, 2
      %v544 = vpop.permute.xlu0 %543
      %v546 = vmul.f32 %v515, %v544
      %v547 = vmul.f32 %v539, %v544
      %v548 = vmul.f32 %v453, %v544
      %v549 = vmul.f32 %v458, %v544
      %v550 = vmul.f32 %v516, %v544
      %v551 = vmul.f32 %v540, %v544
      %v558 = vrot.slane %v546, 1
      %v559 = vrot.slane %v548, 1
      %v560 = vsel %vm524, %v558, %v559
      %v561 = vrot.slane %v547, 1
      %v562 = vrot.slane %v549, 1
      %v563 = vsel %vm524, %v561, %v562
      %v564 = vrot.slane %v550, 1
      %v565 = vsel %vm524, %v559, %v564
      %v566 = vrot.slane %v551, 1
      %v567 = vsel %vm524, %v562, %v566
      %568 = vrot.lane.b32.xlu0 %v560, 126
      %v569 = vpop.permute.xlu0 %568
      %570 = vrot.lane.b32.xlu0 %v563, 126
      %v571 = vpop.permute.xlu0 %570
      %572 = vrot.lane.b32.xlu0 %v565, 126
      %v573 = vpop.permute.xlu0 %572
      %574 = vrot.lane.b32.xlu0 %v567, 126
      %v575 = vpop.permute.xlu0 %574
      %v576 = vsel %vm508, %v569, %v571
      %v577 = vsel %vm508, %v573, %v575
      %v580 = vadd.f32 %v537, %v576
      %v581 = vadd.f32 %v538, %v577
      %v582 = vperm.slane %v145, 3
      %v583 = vadd.f32 %v580, %v582
      %v584 = vadd.f32 %v581, %v582
      %585 = vst [vmem:[%s143] sm:$0xff] %v583
      %586 = vst [vmem:[%s143 + $0x8] sm:$0xff] %v584
      %p587 = scmp.lt.s32.totalorder %s13, 1
      %s588 = scalar_select %p587, %s13, 1
      %s589 = smul.addr %s588, 2
      %s590 = smul.addr %s589, 8
      %s591 = scalar_lea.vmem %s2, %s590
      // Predicated region
      $region29: #{depth_sep_conv2d.1} parent=27 // pred_check
        %p592 = pneg %p78
      $region30: #{depth_sep_conv2d.1} parent=27 // pred_check_branch
        %594 = sbr.rel (%p592) target = $region32
      $region31: #{depth_sep_conv2d.1} parent=27 // pred_region
        _
      $region32: #{depth_sep_conv2d.1} parent=27 // pred_fallthru
        _
    $region28: #{depth_sep_conv2d.1} parent=5 // pred_fallthru
      _
    %p595 = scmp.le.s32.totalorder 2, %s8
    // Predicated region
    $region33: #{depth_sep_conv2d.1} parent=5 // pred_check
      %p596 = pneg %p595
    $region34: #{depth_sep_conv2d.1} parent=5 // pred_check_branch
      %598 = sbr.rel (%p596) target = $region36
    $region35: #{depth_sep_conv2d.1} parent=5 // pred_region
      %s599 = ssub.s32 %s8, 2
      // Predicated region
      $region37: #{depth_sep_conv2d.1} parent=35 // pred_check
        %p600 = pneg %p84
      $region38: #{depth_sep_conv2d.1} parent=35 // pred_check_branch
        %602 = sbr.rel (%p600) target = $region40
      $region39: #{depth_sep_conv2d.1} parent=35 // pred_region
        %p603 = scmp.lt.s32.totalorder %s14, 1
        %s604 = scalar_select %p603, %s14, 1
        %s605 = smul.addr %s604, 2
        %s606 = smul.addr %s605, 8
        %s607 = scalar_lea.vmem %s2, %s606
      $region40: #{depth_sep_conv2d.1} parent=35 // pred_fallthru
        _
    $region36: #{depth_sep_conv2d.1} parent=5 // pred_fallthru
      _
  $region6: #{depth_sep_conv2d.1} parent=0 // loop_footer
    %s12 = sadd.s32 1, %s8
  $region7: #{depth_sep_conv2d.1} parent=0 // loop_footer_branch
    %7 = sbr.rel target = $region3
  $region8: #{depth_sep_conv2d.1} parent=0 // loop_exit
    _

</llo_original>
